<compile_context>
chip_gen: v5e
topology: v5e:2x2
jax: 0.10.0
libtpu: 0.0.40
codegen_flags: <defaults>
</compile_context>

<pallas_src>
import math
import jax
import jax.numpy as jnp
from jax.experimental import pallas as pl
from jax.experimental.pallas import tpu as pltpu

N_DIM = 2          # "n" in the reference module
HIDDEN = 512
K_PAD = 8          # padded contraction dim for layer 1 (y, ones, zeros)
OUT_PAD = 8        # padded sublane dim of the transposed output
DEFAULT_VMEM_LIMIT = 32 * 1024 * 1024


def _round_up(x, m):
    return ((x + m - 1) // m) * m


def _device_kind():
    try:
        return jax.devices()[0].device_kind.lower()
    except Exception:
        return ""


def _select_tb(batch, kind):
    """Batch tile (lane dim): 2048 on v5*, 4096 on v6e/v7x/unknown.
    On v7x keep >= 2 grid steps so the 'parallel' axis shards across both TCs."""
    tb = 2048 if "v5" in kind else 4096
    if "v7" in kind and batch > 128:
        tb = min(tb, _round_up((batch + 1) // 2, 128))
    tb = min(tb, _round_up(batch, 128))
    return max(tb, 128)


def odefunc_kernel(yt_ref, w1t_ref, w2t_ref, b2_ref, out_ref):
    """outT = W2^T_pad @ relu(W1^T_pad @ yT_pad) + b2   (all on the MXU).

    yt_ref : (K_PAD, TB)      f32   rows: [y0, y1, 1, 0...]
    w1t_ref: (HIDDEN, K_PAD)  bf16  cols: [W1^T | b1 | 0...]   (bias folded)
    w2t_ref: (OUT_PAD, HIDDEN)bf16  rows 0..1 = W2^T, rest 0
    b2_ref : (OUT_PAD, 1)     f32   rows 0..1 = b2, rest 0
    out_ref: (OUT_PAD, TB)    f32   rows 0..1 = result (lane-dense writeback)
    """
    w1t = w1t_ref[...]                                   # (HIDDEN, K_PAD)
    w2t = w2t_ref[...]                                   # (OUT_PAD, HIDDEN)
    yt = yt_ref[...].astype(w1t.dtype)                   # (K_PAD, TB), tiny cast

    # Layer 1 on the MXU (K padded to 8, bias folded via the ones row).
    h = jnp.dot(w1t, yt, preferred_element_type=jnp.float32)   # (HIDDEN, TB) f32
    h = jnp.maximum(h, 0.0)                                     # ReLU

    # Layer 2 on the MXU, f32 accumulation; b2 added in f32.
    o = jnp.dot(w2t, h.astype(w2t.dtype),
                preferred_element_type=jnp.float32)             # (OUT_PAD, TB)
    out_ref[...] = (o + b2_ref[...]).astype(out_ref.dtype)


def prepare_params(w1, b1, w2, b2, compute_dtype=jnp.bfloat16):
    """Pad / transpose / cast the weights once (hoist out of solver loops).

    w1: (2, 512), b1: (512,), w2: (512, 2), b2: (2,)  [y @ W1 convention]
    Returns (w1t_pad, w2t_pad, b2_col).
    """
    w1t = jnp.zeros((HIDDEN, K_PAD), compute_dtype)
    w1t = w1t.at[:, :N_DIM].set(w1.T.astype(compute_dtype))
    w1t = w1t.at[:, N_DIM].set(b1.astype(compute_dtype))      # bias column
    w2t = jnp.zeros((OUT_PAD, HIDDEN), compute_dtype)
    w2t = w2t.at[:N_DIM, :].set(w2.T.astype(compute_dtype))
    b2c = jnp.zeros((OUT_PAD, 1), jnp.float32)
    b2c = b2c.at[:N_DIM, 0].set(b2.astype(jnp.float32))
    return w1t, w2t, b2c


def odefunc_apply(y, params, tb=None):
    """out = relu(y @ W1 + b1) @ W2 + b2  via the transposed Pallas kernel."""
    w1t, w2t, b2c = params
    B = y.shape[0]

    TB = tb if tb is not None else _select_tb(B, _device_kind())
    TB = max(128, _round_up(TB, 128))
    TB = min(TB, _round_up(B, 128))
    B_pad = _round_up(B, TB)

    # Lane-dense (along batch) input slab: rows [y0, y1, 1, 0, ...].
    yt = jnp.zeros((K_PAD, B_pad), jnp.float32)
    yt = yt.at[:N_DIM, :B].set(y.T.astype(jnp.float32))
    yt = yt.at[N_DIM, :B].set(1.0)

    grid = (B_pad // TB,)
    out_t = pl.pallas_call(
        odefunc_kernel,
        out_shape=jax.ShapeDtypeStruct((OUT_PAD, B_pad), jnp.float32),
        grid=grid,
        in_specs=[
            pl.BlockSpec((K_PAD, TB), lambda i: (0, i)),        # yT tile
            pl.BlockSpec((HIDDEN, K_PAD), lambda i: (0, 0)),    # W1^T (resident)
            pl.BlockSpec((OUT_PAD, HIDDEN), lambda i: (0, 0)),  # W2^T (resident)
            pl.BlockSpec((OUT_PAD, 1), lambda i: (0, 0)),       # b2   (resident)
        ],
        out_specs=pl.BlockSpec((OUT_PAD, TB), lambda i: (0, i)),
        compiler_params=pltpu.CompilerParams(
            dimension_semantics=("parallel",),
            vmem_limit_bytes=DEFAULT_VMEM_LIMIT),
    )(yt, w1t, w2t, b2c)

    return out_t[:N_DIM, :B].T.astype(y.dtype)


def odefunc_forward(t, y, w1, b1, w2, b2, tb=None):
    """Pallas equivalent of ODEFunc.forward(t, y) -> net(y). `t` is ignored,
    matching the reference semantics. For solver loops, call prepare_params
    once and reuse odefunc_apply instead."""
    del t
    return odefunc_apply(y, prepare_params(w1, b1, w2, b2), tb=tb)


def init_params(key):
    """Deterministic init mimicking PyTorch nn.Linear default:
    U(-1/sqrt(fan_in), 1/sqrt(fan_in)) for both weight and bias.
    Weights stored as (in_features, out_features) so the math is y @ W."""
    k1, k2, k3, k4 = jax.random.split(key, 4)
    bound1 = 1.0 / math.sqrt(N_DIM)
    bound2 = 1.0 / math.sqrt(HIDDEN)
    w1 = jax.random.uniform(k1, (N_DIM, HIDDEN), jnp.float32, -bound1, bound1)
    b1 = jax.random.uniform(k2, (HIDDEN,), jnp.float32, -bound1, bound1)
    w2 = jax.random.uniform(k3, (HIDDEN, N_DIM), jnp.float32, -bound2, bound2)
    b2 = jax.random.uniform(k4, (N_DIM,), jnp.float32, -bound2, bound2)
    return w1, b1, w2, b2


if __name__ == "__main__":
    key = jax.random.PRNGKey(0)
    k_params, k_y1, k_y2 = jax.random.split(key, 3)
    w1, b1, w2, b2 = init_params(k_params)
    params = prepare_params(w1, b1, w2, b2)

    def ref_fn(y):
        return jnp.maximum(y @ w1 + b1, 0.0) @ w2 + b2

    # Small single-tile case (batch=8, n=2).
    batch = 8
    y = jax.random.normal(k_y1, (batch, N_DIM), dtype=jnp.float32)
    t = jnp.float32(0.0)   # unused, as in the reference module
    out = jax.block_until_ready(odefunc_forward(t, y, w1, b1, w2, b2))
    ref = ref_fn(y)
    assert out.shape == (batch, N_DIM)
    # bf16 operands (f32 accumulation) on both matmuls -> loosened tolerance.
    assert jnp.allclose(out, ref, atol=5e-2, rtol=5e-2), (
        f"max abs err {jnp.max(jnp.abs(out - ref))}")

    # Multi-tile / padded-batch case (forces grid=(3,) with tb=128).
    batch2 = 300
    y2 = jax.random.normal(k_y2, (batch2, N_DIM), dtype=jnp.float32)
    out2 = jax.block_until_ready(odefunc_apply(y2, params, tb=128))
    ref2 = ref_fn(y2)
    assert out2.shape == (batch2, N_DIM)
    assert jnp.allclose(out2, ref2, atol=5e-2, rtol=5e-2), (
        f"max abs err {jnp.max(jnp.abs(out2 - ref2))}")

    print("KERNEL_OK")
</pallas_src>

<mosaic_0001>
module attributes {stable_mosaic.version = 11 : i64} {
  func.func @odefunc_kernel(%arg0: i32, %arg1: memref<8x128xf32, #tpu.memory_space<vmem>>, %arg2: memref<512x8xbf16, #tpu.memory_space<vmem>>, %arg3: memref<8x512xbf16, #tpu.memory_space<vmem>>, %arg4: memref<8x1xf32, #tpu.memory_space<vmem>>, %arg5: memref<8x128xf32, #tpu.memory_space<vmem>>) attributes {dimension_semantics = [#tpu.dimension_semantics<parallel>], iteration_bounds = array<i64: 1>, scalar_prefetch = 0 : i64, scratch_operands = 0 : i64, tpu.core_type = #tpu.core_type<tc>, window_params = [{transform_indices = @transform_0, window_bounds = array<i64: 8, 128>}, {pipeline_mode = #tpu.pipeline_mode<synchronous>, transform_indices = @transform_1, window_bounds = array<i64: 512, 8>}, {pipeline_mode = #tpu.pipeline_mode<synchronous>, transform_indices = @transform_2, window_bounds = array<i64: 8, 512>}, {pipeline_mode = #tpu.pipeline_mode<synchronous>, transform_indices = @transform_3, window_bounds = array<i64: 8, 1>}, {transform_indices = @transform_4, window_bounds = array<i64: 8, 128>}]} {
    %c0 = arith.constant 0 : index
    %c0_0 = arith.constant 0 : index
    %0 = vector.load %arg2[%c0, %c0_0] : memref<512x8xbf16, #tpu.memory_space<vmem>>, vector<512x8xbf16>
    %c0_1 = arith.constant 0 : index
    %c0_2 = arith.constant 0 : index
    %1 = vector.load %arg3[%c0_1, %c0_2] : memref<8x512xbf16, #tpu.memory_space<vmem>>, vector<8x512xbf16>
    %c0_3 = arith.constant 0 : index
    %c0_4 = arith.constant 0 : index
    %2 = vector.load %arg1[%c0_3, %c0_4] : memref<8x128xf32, #tpu.memory_space<vmem>>, vector<8x128xf32>
    %3 = arith.truncf %2 : vector<8x128xf32> to vector<8x128xbf16>
    %cst = arith.constant dense<0.000000e+00> : vector<512x128xf32>
    %4 = tpu.matmul %0, %3, %cst {dimension_numbers = #tpu.dot_dimension_numbers<[1], [0], [0], [1], [0, 0, 1, 1], [], []>} : vector<512x8xbf16>, vector<8x128xbf16>, vector<512x128xf32> -> vector<512x128xf32>
    %cst_5 = arith.constant 0.000000e+00 : f32
    %5 = vector.broadcast %cst_5 : f32 to vector<512x128xf32>
    %6 = arith.maximumf %4, %5 : vector<512x128xf32>
    %7 = arith.truncf %6 : vector<512x128xf32> to vector<512x128xbf16>
    %cst_6 = arith.constant dense<0.000000e+00> : vector<8x128xf32>
    %8 = tpu.matmul %1, %7, %cst_6 {dimension_numbers = #tpu.dot_dimension_numbers<[1], [0], [0], [1], [0, 0, 1, 1], [], []>} : vector<8x512xbf16>, vector<512x128xbf16>, vector<8x128xf32> -> vector<8x128xf32>
    %c0_7 = arith.constant 0 : index
    %c0_8 = arith.constant 0 : index
    %9 = vector.load %arg4[%c0_7, %c0_8] : memref<8x1xf32, #tpu.memory_space<vmem>>, vector<8x1xf32>
    %10 = vector.broadcast %9 : vector<8x1xf32> to vector<8x128xf32>
    %11 = arith.addf %8, %10 : vector<8x128xf32>
    %c0_9 = arith.constant 0 : index
    %c0_10 = arith.constant 0 : index
    %12 = vector.load %arg5[%c0_9, %c0_10] : memref<8x128xf32, #tpu.memory_space<vmem>>, vector<8x128xf32>
    tpu.vector_store %arg5[%c0_9, %c0_10], %11 {strides = array<i32>} : memref<8x128xf32, #tpu.memory_space<vmem>>, vector<8x128xf32>,
    return
  }
  func.func @transform_0(%arg0: i32) -> (i32, i32) {
    %c0_i32 = arith.constant 0 : i32
    %c0_i32_0 = arith.constant 0 : i32
    return %c0_i32, %arg0 : i32, i32
  }
  func.func @transform_1(%arg0: i32) -> (i32, i32) {
    %c0_i32 = arith.constant 0 : i32
    %c0_i32_0 = arith.constant 0 : i32
    %c0_i32_1 = arith.constant 0 : i32
    return %c0_i32, %c0_i32_0 : i32, i32
  }
  func.func @transform_2(%arg0: i32) -> (i32, i32) {
    %c0_i32 = arith.constant 0 : i32
    %c0_i32_0 = arith.constant 0 : i32
    %c0_i32_1 = arith.constant 0 : i32
    return %c0_i32, %c0_i32_0 : i32, i32
  }
  func.func @transform_3(%arg0: i32) -> (i32, i32) {
    %c0_i32 = arith.constant 0 : i32
    %c0_i32_0 = arith.constant 0 : i32
    %c0_i32_1 = arith.constant 0 : i32
    return %c0_i32, %c0_i32_0 : i32, i32
  }
  func.func @transform_4(%arg0: i32) -> (i32, i32) {
    %c0_i32 = arith.constant 0 : i32
    %c0_i32_0 = arith.constant 0 : i32
    return %c0_i32, %arg0 : i32, i32
  }
}

</mosaic_0001>

<llo_original>
// kernel: tpu_custom_call.1
$region0: #{tpu_custom_call.1}
  #allocation0 [shape = 'u32[]', space=smem, size = 0x4, offset = 0x4, fixed_abs, tag = 'smem constant byte address 0x4 - core index']
  #allocation1 [shape = 'u32[72,128]{1,0:T(1,128)}', space=vmem, size = 0x9000, scoped, tag = 'internal scratch']
  %s0 = inlined_call_operand.vmem [shape: f32[8,128], index: 0, kind: input, shape index: {}]
  %s1 = inlined_call_operand.vmem [shape: bf16[512,8], index: 1, kind: input, shape index: {}]
  %s2 = inlined_call_operand.vmem [shape: bf16[8,512], index: 2, kind: input, shape index: {}]
  %s3 = inlined_call_operand.vmem [shape: f32[8,1], index: 3, kind: input, shape index: {}]
  %s4 = inlined_call_operand.hbm [shape: f32[8,128], index: 4, kind: output, shape index: {}]
  %s5 = sld [smem:[#allocation0]]
  $region26: #{tpu_custom_call.1} parent=0
    _
  %s7 = ssub.s32 1, %s5
  %s8 = scalar_select 0, %s7, %s5
  $region1: #{tpu_custom_call.1} parent=0
    #allocation2 [shape = 'u8[4096]{0}', space=vmem, size = 0x1000, scoped, tag = 'output window, operand 0, single buffered']
    #allocation3 [shape = 's32[1]{0}', space=sflag, size = 0x4, scoped, tag = 'scoped memory for tpu_custom_call.1']
    %9 = vsyncpa [#allocation3], 0
    // Predicated region
    $region2: #{tpu_custom_call.1} parent=1 // pred_check
      _
    $region3: #{tpu_custom_call.1} parent=1 // pred_check_branch
      %11 = sbr.rel (0) target = $region5
    $region4: #{tpu_custom_call.1} parent=1 // pred_region
      _
    $region5: #{tpu_custom_call.1} parent=1 // pred_fallthru
      _
    // Predicated region
    $region6: #{tpu_custom_call.1} parent=1 // pred_check
      _
    $region7: #{tpu_custom_call.1} parent=1 // pred_check_branch
      %13 = sbr.rel (0) target = $region9
    $region8: #{tpu_custom_call.1} parent=1 // pred_region
      _
    $region9: #{tpu_custom_call.1} parent=1 // pred_fallthru
      _
    // Predicated region
    $region10: #{tpu_custom_call.1} parent=1 // pred_check
      _
    $region11: #{tpu_custom_call.1} parent=1 // pred_check_branch
      %15 = sbr.rel (0) target = $region13
    $region12: #{tpu_custom_call.1} parent=1 // pred_region
      _
    $region13: #{tpu_custom_call.1} parent=1 // pred_fallthru
      _
    // Predicated region
    $region14: #{tpu_custom_call.1} parent=1 // pred_check
      _
    $region15: #{tpu_custom_call.1} parent=1 // pred_check_branch
      %17 = sbr.rel (0) target = $region17
    $region16: #{tpu_custom_call.1} parent=1 // pred_region
      _
    $region17: #{tpu_custom_call.1} parent=1 // pred_fallthru
      _
    %v19 = vld [vmem:[%s1] sm:$0xf]
    %v20 = vld [vmem:[%s1 + $0x4] sm:$0xf]
    %v21 = vld [vmem:[%s1 + $0x8] sm:$0xf]
    %v22 = vld [vmem:[%s1 + $0xc] sm:$0xf]
    %v23 = vld [vmem:[%s1 + $0x10] sm:$0xf]
    %v24 = vld [vmem:[%s1 + $0x14] sm:$0xf]
    %v25 = vld [vmem:[%s1 + $0x18] sm:$0xf]
    %v26 = vld [vmem:[%s1 + $0x1c] sm:$0xf]
    %v27 = vld [vmem:[%s1 + $0x20] sm:$0xf]
    %v28 = vld [vmem:[%s1 + $0x24] sm:$0xf]
    %v29 = vld [vmem:[%s1 + $0x28] sm:$0xf]
    %v30 = vld [vmem:[%s1 + $0x2c] sm:$0xf]
    %v31 = vld [vmem:[%s1 + $0x30] sm:$0xf]
    %v32 = vld [vmem:[%s1 + $0x34] sm:$0xf]
    %v33 = vld [vmem:[%s1 + $0x38] sm:$0xf]
    %v34 = vld [vmem:[%s1 + $0x3c] sm:$0xf]
    %v35 = vld [vmem:[%s1 + $0x40] sm:$0xf]
    %v36 = vld [vmem:[%s1 + $0x44] sm:$0xf]
    %v37 = vld [vmem:[%s1 + $0x48] sm:$0xf]
    %v38 = vld [vmem:[%s1 + $0x4c] sm:$0xf]
    %v39 = vld [vmem:[%s1 + $0x50] sm:$0xf]
    %v40 = vld [vmem:[%s1 + $0x54] sm:$0xf]
    %v41 = vld [vmem:[%s1 + $0x58] sm:$0xf]
    %v42 = vld [vmem:[%s1 + $0x5c] sm:$0xf]
    %v43 = vld [vmem:[%s1 + $0x60] sm:$0xf]
    %v44 = vld [vmem:[%s1 + $0x64] sm:$0xf]
    %v45 = vld [vmem:[%s1 + $0x68] sm:$0xf]
    %v46 = vld [vmem:[%s1 + $0x6c] sm:$0xf]
    %v47 = vld [vmem:[%s1 + $0x70] sm:$0xf]
    %v48 = vld [vmem:[%s1 + $0x74] sm:$0xf]
    %v49 = vld [vmem:[%s1 + $0x78] sm:$0xf]
    %v50 = vld [vmem:[%s1 + $0x7c] sm:$0xf]
    %v51 = vld [vmem:[%s1 + $0x80] sm:$0xf]
    %v52 = vld [vmem:[%s1 + $0x84] sm:$0xf]
    %v53 = vld [vmem:[%s1 + $0x88] sm:$0xf]
    %v54 = vld [vmem:[%s1 + $0x8c] sm:$0xf]
    %v55 = vld [vmem:[%s1 + $0x90] sm:$0xf]
    %v56 = vld [vmem:[%s1 + $0x94] sm:$0xf]
    %v57 = vld [vmem:[%s1 + $0x98] sm:$0xf]
    %v58 = vld [vmem:[%s1 + $0x9c] sm:$0xf]
    %v59 = vld [vmem:[%s1 + $0xa0] sm:$0xf]
    %v60 = vld [vmem:[%s1 + $0xa4] sm:$0xf]
    %v61 = vld [vmem:[%s1 + $0xa8] sm:$0xf]
    %v62 = vld [vmem:[%s1 + $0xac] sm:$0xf]
    %v63 = vld [vmem:[%s1 + $0xb0] sm:$0xf]
    %v64 = vld [vmem:[%s1 + $0xb4] sm:$0xf]
    %v65 = vld [vmem:[%s1 + $0xb8] sm:$0xf]
    %v66 = vld [vmem:[%s1 + $0xbc] sm:$0xf]
    %v67 = vld [vmem:[%s1 + $0xc0] sm:$0xf]
    %v68 = vld [vmem:[%s1 + $0xc4] sm:$0xf]
    %v69 = vld [vmem:[%s1 + $0xc8] sm:$0xf]
    %v70 = vld [vmem:[%s1 + $0xcc] sm:$0xf]
    %v71 = vld [vmem:[%s1 + $0xd0] sm:$0xf]
    %v72 = vld [vmem:[%s1 + $0xd4] sm:$0xf]
    %v73 = vld [vmem:[%s1 + $0xd8] sm:$0xf]
    %v74 = vld [vmem:[%s1 + $0xdc] sm:$0xf]
    %v75 = vld [vmem:[%s1 + $0xe0] sm:$0xf]
    %v76 = vld [vmem:[%s1 + $0xe4] sm:$0xf]
    %v77 = vld [vmem:[%s1 + $0xe8] sm:$0xf]
    %v78 = vld [vmem:[%s1 + $0xec] sm:$0xf]
    %v79 = vld [vmem:[%s1 + $0xf0] sm:$0xf]
    %v80 = vld [vmem:[%s1 + $0xf4] sm:$0xf]
    %v81 = vld [vmem:[%s1 + $0xf8] sm:$0xf]
    %v82 = vld [vmem:[%s1 + $0xfc] sm:$0xf]
    %v83 = vld [vmem:[%s2] sm:$0xff]
    %v84 = vld [vmem:[%s2 + $0x8] sm:$0xff]
    %v85 = vld [vmem:[%s0] sm:$0xff]
    %v86 = vpack.c.bf16 %v85, %v85
    %v151 = vunpack.c.l.b16 %v19
    %v152 = vunpack.c.l.b16 %v20
    %v153 = vunpack.c.l.b16 %v21
    %v154 = vunpack.c.l.b16 %v22
    %v155 = vunpack.c.l.b16 %v23
    %v156 = vunpack.c.l.b16 %v24
    %v157 = vunpack.c.l.b16 %v25
    %v158 = vunpack.c.l.b16 %v26
    %v159 = vunpack.c.l.b16 %v27
    %v160 = vunpack.c.l.b16 %v28
    %v161 = vunpack.c.l.b16 %v29
    %v162 = vunpack.c.l.b16 %v30
    %v163 = vunpack.c.l.b16 %v31
    %v164 = vunpack.c.l.b16 %v32
    %v165 = vunpack.c.l.b16 %v33
    %v166 = vunpack.c.l.b16 %v34
    %v167 = vunpack.c.l.b16 %v35
    %v168 = vunpack.c.l.b16 %v36
    %v169 = vunpack.c.l.b16 %v37
    %v170 = vunpack.c.l.b16 %v38
    %v171 = vunpack.c.l.b16 %v39
    %v172 = vunpack.c.l.b16 %v40
    %v173 = vunpack.c.l.b16 %v41
    %v174 = vunpack.c.l.b16 %v42
    %v175 = vunpack.c.l.b16 %v43
    %v176 = vunpack.c.l.b16 %v44
    %v177 = vunpack.c.l.b16 %v45
    %v178 = vunpack.c.l.b16 %v46
    %v179 = vunpack.c.l.b16 %v47
    %v180 = vunpack.c.l.b16 %v48
    %v181 = vunpack.c.l.b16 %v49
    %v182 = vunpack.c.l.b16 %v50
    %v183 = vunpack.c.l.b16 %v51
    %v184 = vunpack.c.l.b16 %v52
    %v185 = vunpack.c.l.b16 %v53
    %v186 = vunpack.c.l.b16 %v54
    %v187 = vunpack.c.l.b16 %v55
    %v188 = vunpack.c.l.b16 %v56
    %v189 = vunpack.c.l.b16 %v57
    %v190 = vunpack.c.l.b16 %v58
    %v191 = vunpack.c.l.b16 %v59
    %v192 = vunpack.c.l.b16 %v60
    %v193 = vunpack.c.l.b16 %v61
    %v194 = vunpack.c.l.b16 %v62
    %v195 = vunpack.c.l.b16 %v63
    %v196 = vunpack.c.l.b16 %v64
    %v197 = vunpack.c.l.b16 %v65
    %v198 = vunpack.c.l.b16 %v66
    %v199 = vunpack.c.l.b16 %v67
    %v200 = vunpack.c.l.b16 %v68
    %v201 = vunpack.c.l.b16 %v69
    %v202 = vunpack.c.l.b16 %v70
    %v203 = vunpack.c.l.b16 %v71
    %v204 = vunpack.c.l.b16 %v72
    %v205 = vunpack.c.l.b16 %v73
    %v206 = vunpack.c.l.b16 %v74
    %v207 = vunpack.c.l.b16 %v75
    %v208 = vunpack.c.l.b16 %v76
    %v209 = vunpack.c.l.b16 %v77
    %v210 = vunpack.c.l.b16 %v78
    %v211 = vunpack.c.l.b16 %v79
    %v212 = vunpack.c.l.b16 %v80
    %v213 = vunpack.c.l.b16 %v81
    %v214 = vunpack.c.l.b16 %v82
    %v215 = vpack.c.b16 %v152, %v151
    %v216 = vpack.c.b16 %v154, %v153
    %v217 = vpack.c.b16 %v156, %v155
    %v218 = vpack.c.b16 %v158, %v157
    %v219 = vpack.c.b16 %v160, %v159
    %v220 = vpack.c.b16 %v162, %v161
    %v221 = vpack.c.b16 %v164, %v163
    %v222 = vpack.c.b16 %v166, %v165
    %v223 = vpack.c.b16 %v168, %v167
    %v224 = vpack.c.b16 %v170, %v169
    %v225 = vpack.c.b16 %v172, %v171
    %v226 = vpack.c.b16 %v174, %v173
    %v227 = vpack.c.b16 %v176, %v175
    %v228 = vpack.c.b16 %v178, %v177
    %v229 = vpack.c.b16 %v180, %v179
    %v230 = vpack.c.b16 %v182, %v181
    %v231 = vpack.c.b16 %v184, %v183
    %v232 = vpack.c.b16 %v186, %v185
    %v233 = vpack.c.b16 %v188, %v187
    %v234 = vpack.c.b16 %v190, %v189
    %v235 = vpack.c.b16 %v192, %v191
    %v236 = vpack.c.b16 %v194, %v193
    %v237 = vpack.c.b16 %v196, %v195
    %v238 = vpack.c.b16 %v198, %v197
    %v239 = vpack.c.b16 %v200, %v199
    %v240 = vpack.c.b16 %v202, %v201
    %v241 = vpack.c.b16 %v204, %v203
    %v242 = vpack.c.b16 %v206, %v205
    %v243 = vpack.c.b16 %v208, %v207
    %v244 = vpack.c.b16 %v210, %v209
    %v245 = vpack.c.b16 %v212, %v211
    %v246 = vpack.c.b16 %v214, %v213
    %vm247 = vcmask 64512
    %v249 = vsel %vm247, %v215, 0
    %v252 = vsel %vm247, %v216, 0
    %v255 = vsel %vm247, %v217, 0
    %v258 = vsel %vm247, %v218, 0
    %v261 = vsel %vm247, %v219, 0
    %v264 = vsel %vm247, %v220, 0
    %v267 = vsel %vm247, %v221, 0
    %v270 = vsel %vm247, %v222, 0
    %v273 = vsel %vm247, %v223, 0
    %v276 = vsel %vm247, %v224, 0
    %v279 = vsel %vm247, %v225, 0
    %v282 = vsel %vm247, %v226, 0
    %v285 = vsel %vm247, %v227, 0
    %v288 = vsel %vm247, %v228, 0
    %v291 = vsel %vm247, %v229, 0
    %v294 = vsel %vm247, %v230, 0
    %v297 = vsel %vm247, %v231, 0
    %v300 = vsel %vm247, %v232, 0
    %v303 = vsel %vm247, %v233, 0
    %v306 = vsel %vm247, %v234, 0
    %v309 = vsel %vm247, %v235, 0
    %v312 = vsel %vm247, %v236, 0
    %v315 = vsel %vm247, %v237, 0
    %v318 = vsel %vm247, %v238, 0
    %v321 = vsel %vm247, %v239, 0
    %v324 = vsel %vm247, %v240, 0
    %v327 = vsel %vm247, %v241, 0
    %v330 = vsel %vm247, %v242, 0
    %v333 = vsel %vm247, %v243, 0
    %v336 = vsel %vm247, %v244, 0
    %v339 = vsel %vm247, %v245, 0
    %v342 = vsel %vm247, %v246, 0
    %vm344 = vcmask 1043456
    %v346 = vsel %vm344, %v86, 0
    %348 = vmatpush.bf16.msra.mxu0 0
    %349 = vmatpush.bf16.msra.mxu0 0
    %350 = vmatpush.bf16.msra.mxu0 0
    %351 = vmatpush.bf16.msra.mxu0 0
    %352 = vmatpush.bf16.msra.mxu0 0
    %353 = vmatpush.bf16.msra.mxu0 0
    %354 = vmatpush.bf16.msra.mxu0 0
    %355 = vmatpush.bf16.msra.mxu0 %v346
    %356 = vmatmul.bf16.gmra.mxu0 %v249
    %v357 = vpop.f32.mrf.mxu0
    %v358 = vadd.f32 0.0, %v357
    %v359 = vpop.f32.mrf.mxu0
    %v360 = vadd.f32 0.0, %v359
    %361 = vmatmul.bf16.gmra.mxu0 %v252
    %v362 = vpop.f32.mrf.mxu0
    %v363 = vadd.f32 0.0, %v362
    %v364 = vpop.f32.mrf.mxu0
    %v365 = vadd.f32 0.0, %v364
    %366 = vmatmul.bf16.gmra.mxu0 %v255
    %v367 = vpop.f32.mrf.mxu0
    %v368 = vadd.f32 0.0, %v367
    %v369 = vpop.f32.mrf.mxu0
    %v370 = vadd.f32 0.0, %v369
    %371 = vmatmul.bf16.gmra.mxu0 %v258
    %v372 = vpop.f32.mrf.mxu0
    %v373 = vadd.f32 0.0, %v372
    %v374 = vpop.f32.mrf.mxu0
    %v375 = vadd.f32 0.0, %v374
    %376 = vmatmul.bf16.gmra.mxu0 %v261
    %v377 = vpop.f32.mrf.mxu0
    %v378 = vadd.f32 0.0, %v377
    %v379 = vpop.f32.mrf.mxu0
    %v380 = vadd.f32 0.0, %v379
    %381 = vmatmul.bf16.gmra.mxu0 %v264
    %v382 = vpop.f32.mrf.mxu0
    %v383 = vadd.f32 0.0, %v382
    %v384 = vpop.f32.mrf.mxu0
    %v385 = vadd.f32 0.0, %v384
    %386 = vmatmul.bf16.gmra.mxu0 %v267
    %v387 = vpop.f32.mrf.mxu0
    %v388 = vadd.f32 0.0, %v387
    %v389 = vpop.f32.mrf.mxu0
    %v390 = vadd.f32 0.0, %v389
    %391 = vmatmul.bf16.gmra.mxu0 %v270
    %v392 = vpop.f32.mrf.mxu0
    %v393 = vadd.f32 0.0, %v392
    %v394 = vpop.f32.mrf.mxu0
    %v395 = vadd.f32 0.0, %v394
    %396 = vmatmul.bf16.gmra.mxu0 %v273
    %v397 = vpop.f32.mrf.mxu0
    %v398 = vadd.f32 0.0, %v397
    %v399 = vpop.f32.mrf.mxu0
    %v400 = vadd.f32 0.0, %v399
    %401 = vmatmul.bf16.gmra.mxu0 %v276
    %v402 = vpop.f32.mrf.mxu0
    %v403 = vadd.f32 0.0, %v402
    %v404 = vpop.f32.mrf.mxu0
    %v405 = vadd.f32 0.0, %v404
    %406 = vmatmul.bf16.gmra.mxu0 %v279
    %v407 = vpop.f32.mrf.mxu0
    %v408 = vadd.f32 0.0, %v407
    %v409 = vpop.f32.mrf.mxu0
    %v410 = vadd.f32 0.0, %v409
    %411 = vmatmul.bf16.gmra.mxu0 %v282
    %v412 = vpop.f32.mrf.mxu0
    %v413 = vadd.f32 0.0, %v412
    %v414 = vpop.f32.mrf.mxu0
    %v415 = vadd.f32 0.0, %v414
    %416 = vmatmul.bf16.gmra.mxu0 %v285
    %v417 = vpop.f32.mrf.mxu0
    %v418 = vadd.f32 0.0, %v417
    %v419 = vpop.f32.mrf.mxu0
    %v420 = vadd.f32 0.0, %v419
    %421 = vmatmul.bf16.gmra.mxu0 %v288
    %v422 = vpop.f32.mrf.mxu0
    %v423 = vadd.f32 0.0, %v422
    %v424 = vpop.f32.mrf.mxu0
    %v425 = vadd.f32 0.0, %v424
    %426 = vmatmul.bf16.gmra.mxu0 %v291
    %v427 = vpop.f32.mrf.mxu0
    %v428 = vadd.f32 0.0, %v427
    %v429 = vpop.f32.mrf.mxu0
    %v430 = vadd.f32 0.0, %v429
    %431 = vmatmul.bf16.gmra.mxu0 %v294
    %v432 = vpop.f32.mrf.mxu0
    %v433 = vadd.f32 0.0, %v432
    %v434 = vpop.f32.mrf.mxu0
    %v435 = vadd.f32 0.0, %v434
    %436 = vmatmul.bf16.gmra.mxu0 %v297
    %v437 = vpop.f32.mrf.mxu0
    %v438 = vadd.f32 0.0, %v437
    %v439 = vpop.f32.mrf.mxu0
    %v440 = vadd.f32 0.0, %v439
    %441 = vmatmul.bf16.gmra.mxu0 %v300
    %v442 = vpop.f32.mrf.mxu0
    %v443 = vadd.f32 0.0, %v442
    %v444 = vpop.f32.mrf.mxu0
    %v445 = vadd.f32 0.0, %v444
    %446 = vmatmul.bf16.gmra.mxu0 %v303
    %v447 = vpop.f32.mrf.mxu0
    %v448 = vadd.f32 0.0, %v447
    %v449 = vpop.f32.mrf.mxu0
    %v450 = vadd.f32 0.0, %v449
    %451 = vmatmul.bf16.gmra.mxu0 %v306
    %v452 = vpop.f32.mrf.mxu0
    %v453 = vadd.f32 0.0, %v452
    %v454 = vpop.f32.mrf.mxu0
    %v455 = vadd.f32 0.0, %v454
    %456 = vmatmul.bf16.gmra.mxu0 %v309
    %v457 = vpop.f32.mrf.mxu0
    %v458 = vadd.f32 0.0, %v457
    %v459 = vpop.f32.mrf.mxu0
    %v460 = vadd.f32 0.0, %v459
    %461 = vmatmul.bf16.gmra.mxu0 %v312
    %v462 = vpop.f32.mrf.mxu0
    %v463 = vadd.f32 0.0, %v462
    %v464 = vpop.f32.mrf.mxu0
    %v465 = vadd.f32 0.0, %v464
    %466 = vmatmul.bf16.gmra.mxu0 %v315
    %v467 = vpop.f32.mrf.mxu0
    %v468 = vadd.f32 0.0, %v467
    %v469 = vpop.f32.mrf.mxu0
    %v470 = vadd.f32 0.0, %v469
    %471 = vmatmul.bf16.gmra.mxu0 %v318
    %v472 = vpop.f32.mrf.mxu0
    %v473 = vadd.f32 0.0, %v472
    %v474 = vpop.f32.mrf.mxu0
    %v475 = vadd.f32 0.0, %v474
    %476 = vmatmul.bf16.gmra.mxu0 %v321
    %v477 = vpop.f32.mrf.mxu0
    %v478 = vadd.f32 0.0, %v477
    %v479 = vpop.f32.mrf.mxu0
    %v480 = vadd.f32 0.0, %v479
    %481 = vmatmul.bf16.gmra.mxu0 %v324
    %v482 = vpop.f32.mrf.mxu0
    %v483 = vadd.f32 0.0, %v482
    %v484 = vpop.f32.mrf.mxu0
    %v485 = vadd.f32 0.0, %v484
    %486 = vmatmul.bf16.gmra.mxu0 %v327
    %v487 = vpop.f32.mrf.mxu0
    %v488 = vadd.f32 0.0, %v487
    %v489 = vpop.f32.mrf.mxu0
    %v490 = vadd.f32 0.0, %v489
    %491 = vmatmul.bf16.gmra.mxu0 %v330
    %v492 = vpop.f32.mrf.mxu0
    %v493 = vadd.f32 0.0, %v492
    %v494 = vpop.f32.mrf.mxu0
    %v495 = vadd.f32 0.0, %v494
    %496 = vmatmul.bf16.gmra.mxu0 %v333
    %v497 = vpop.f32.mrf.mxu0
    %v498 = vadd.f32 0.0, %v497
    %v499 = vpop.f32.mrf.mxu0
    %v500 = vadd.f32 0.0, %v499
    %501 = vmatmul.bf16.gmra.mxu0 %v336
    %v502 = vpop.f32.mrf.mxu0
    %v503 = vadd.f32 0.0, %v502
    %v504 = vpop.f32.mrf.mxu0
    %v505 = vadd.f32 0.0, %v504
    %506 = vmatmul.bf16.gmra.mxu0 %v339
    %v507 = vpop.f32.mrf.mxu0
    %v508 = vadd.f32 0.0, %v507
    %v509 = vpop.f32.mrf.mxu0
    %v510 = vadd.f32 0.0, %v509
    %511 = vmatmul.bf16.gmra.mxu0 %v342
    %v512 = vpop.f32.mrf.mxu0
    %v513 = vadd.f32 0.0, %v512
    %v514 = vpop.f32.mrf.mxu0
    %v515 = vadd.f32 0.0, %v514
    %516 = vdwg.mxu0
    %v517 = vmax.f32 %v358, 0.0
    %v518 = vmax.f32 %v360, 0.0
    %v519 = vmax.f32 %v363, 0.0
    %v520 = vmax.f32 %v365, 0.0
    %v521 = vmax.f32 %v368, 0.0
    %v522 = vmax.f32 %v370, 0.0
    %v523 = vmax.f32 %v373, 0.0
    %v524 = vmax.f32 %v375, 0.0
    %v525 = vmax.f32 %v378, 0.0
    %v526 = vmax.f32 %v380, 0.0
    %v527 = vmax.f32 %v383, 0.0
    %v528 = vmax.f32 %v385, 0.0
    %v529 = vmax.f32 %v388, 0.0
    %v530 = vmax.f32 %v390, 0.0
    %v531 = vmax.f32 %v393, 0.0
    %v532 = vmax.f32 %v395, 0.0
    %v533 = vmax.f32 %v398, 0.0
    %v534 = vmax.f32 %v400, 0.0
    %v535 = vmax.f32 %v403, 0.0
    %v536 = vmax.f32 %v405, 0.0
    %v537 = vmax.f32 %v408, 0.0
    %v538 = vmax.f32 %v410, 0.0
    %v539 = vmax.f32 %v413, 0.0
    %v540 = vmax.f32 %v415, 0.0
    %v541 = vmax.f32 %v418, 0.0
    %v542 = vmax.f32 %v420, 0.0
    %v543 = vmax.f32 %v423, 0.0
    %v544 = vmax.f32 %v425, 0.0
    %v545 = vmax.f32 %v428, 0.0
    %v546 = vmax.f32 %v430, 0.0
    %v547 = vmax.f32 %v433, 0.0
    %v548 = vmax.f32 %v435, 0.0
    %v549 = vmax.f32 %v438, 0.0
    %v550 = vmax.f32 %v440, 0.0
    %v551 = vmax.f32 %v443, 0.0
    %v552 = vmax.f32 %v445, 0.0
    %v553 = vmax.f32 %v448, 0.0
    %v554 = vmax.f32 %v450, 0.0
    %v555 = vmax.f32 %v453, 0.0
    %v556 = vmax.f32 %v455, 0.0
    %v557 = vmax.f32 %v458, 0.0
    %v558 = vmax.f32 %v460, 0.0
    %v559 = vmax.f32 %v463, 0.0
    %v560 = vmax.f32 %v465, 0.0
    %v561 = vmax.f32 %v468, 0.0
    %v562 = vmax.f32 %v470, 0.0
    %v563 = vmax.f32 %v473, 0.0
    %v564 = vmax.f32 %v475, 0.0
    %v565 = vmax.f32 %v478, 0.0
    %v566 = vmax.f32 %v480, 0.0
    %v567 = vmax.f32 %v483, 0.0
    %v568 = vmax.f32 %v485, 0.0
    %v569 = vmax.f32 %v488, 0.0
    %v570 = vmax.f32 %v490, 0.0
    %v571 = vmax.f32 %v493, 0.0
    %v572 = vmax.f32 %v495, 0.0
    %v573 = vmax.f32 %v498, 0.0
    %v574 = vmax.f32 %v500, 0.0
    %v575 = vmax.f32 %v503, 0.0
    %v576 = vmax.f32 %v505, 0.0
    %v577 = vmax.f32 %v508, 0.0
    %v578 = vmax.f32 %v510, 0.0
    %v579 = vmax.f32 %v513, 0.0
    %v580 = vmax.f32 %v515, 0.0
    %v581 = vpack.c.bf16 %v518, %v517
    %v582 = vpack.c.bf16 %v520, %v519
    %v583 = vpack.c.bf16 %v522, %v521
    %v584 = vpack.c.bf16 %v524, %v523
    %v585 = vpack.c.bf16 %v526, %v525
    %v586 = vpack.c.bf16 %v528, %v527
    %v587 = vpack.c.bf16 %v530, %v529
    %v588 = vpack.c.bf16 %v532, %v531
    %v589 = vpack.c.bf16 %v534, %v533
    %v590 = vpack.c.bf16 %v536, %v535
    %v591 = vpack.c.bf16 %v538, %v537
    %v592 = vpack.c.bf16 %v540, %v539
    %v593 = vpack.c.bf16 %v542, %v541
    %v594 = vpack.c.bf16 %v544, %v543
    %v595 = vpack.c.bf16 %v546, %v545
    %v596 = vpack.c.bf16 %v548, %v547
    %v597 = vpack.c.bf16 %v550, %v549
    %v598 = vpack.c.bf16 %v552, %v551
    %v599 = vpack.c.bf16 %v554, %v553
    %v600 = vpack.c.bf16 %v556, %v555
    %v601 = vpack.c.bf16 %v558, %v557
    %v602 = vpack.c.bf16 %v560, %v559
    %v603 = vpack.c.bf16 %v562, %v561
    %v604 = vpack.c.bf16 %v564, %v563
    %v605 = vpack.c.bf16 %v566, %v565
    %v606 = vpack.c.bf16 %v568, %v567
    %v607 = vpack.c.bf16 %v570, %v569
    %v608 = vpack.c.bf16 %v572, %v571
    %v609 = vpack.c.bf16 %v574, %v573
    %v610 = vpack.c.bf16 %v576, %v575
    %v611 = vpack.c.bf16 %v578, %v577
    %v612 = vpack.c.bf16 %v580, %v579
    %v613 = vld [vmem:[%s3] sm:$0xff]
    %615 = vset.pattern.permute.xlu0 0
    %616 = vperm.xlu0 %615, %v613
    %v617 = vpop.permute.xlu0 %616
    %v621 = vunpack.c.l.b16 %v83
    %v622 = vunpack.c.h.b16 %v83
    %v623 = vunpack.c.l.b16 %v84
    %v624 = vunpack.c.h.b16 %v84
    %v625 = vpack.c.b16 %v621, %v621
    %v626 = vpack.c.b16 %v622, %v622
    %v627 = vpack.c.b16 %v623, %v623
    %v628 = vpack.c.b16 %v624, %v624
    %633 = vmatpush.bf16.msra.mxu0 %v588
    %634 = vmatpush.bf16.msra.mxu0 %v587
    %635 = vmatpush.bf16.msra.mxu0 %v586
    %636 = vmatpush.bf16.msra.mxu0 %v585
    %637 = vmatpush.bf16.msra.mxu0 %v584
    %638 = vmatpush.bf16.msra.mxu0 %v583
    %639 = vmatpush.bf16.msra.mxu0 %v582
    %640 = vmatpush.bf16.msra.mxu0 %v581
    %641 = vmatmul.bf16.gmra.mxu0 %v625
    %v642 = vpop.f32.mrf.mxu0
    %v643 = vadd.f32 %v617, %v642
    %v644 = vpop.f32.mrf.mxu0
    %645 = vdwg.mxu0
    %646 = vmatpush.bf16.msra.mxu0 %v596
    %647 = vmatpush.bf16.msra.mxu0 %v595
    %648 = vmatpush.bf16.msra.mxu0 %v594
    %649 = vmatpush.bf16.msra.mxu0 %v593
    %650 = vmatpush.bf16.msra.mxu0 %v592
    %651 = vmatpush.bf16.msra.mxu0 %v591
    %652 = vmatpush.bf16.msra.mxu0 %v590
    %653 = vmatpush.bf16.msra.mxu0 %v589
    %654 = vmatmul.bf16.gmra.mxu0 %v626
    %v655 = vpop.f32.mrf.mxu0
    %v656 = vadd.f32 %v643, %v655
    %v657 = vpop.f32.mrf.mxu0
    %658 = vdwg.mxu0
    %659 = vmatpush.bf16.msra.mxu0 %v604
    %660 = vmatpush.bf16.msra.mxu0 %v603
    %661 = vmatpush.bf16.msra.mxu0 %v602
    %662 = vmatpush.bf16.msra.mxu0 %v601
    %663 = vmatpush.bf16.msra.mxu0 %v600
    %664 = vmatpush.bf16.msra.mxu0 %v599
    %665 = vmatpush.bf16.msra.mxu0 %v598
    %666 = vmatpush.bf16.msra.mxu0 %v597
    %667 = vmatmul.bf16.gmra.mxu0 %v627
    %v668 = vpop.f32.mrf.mxu0
    %v669 = vadd.f32 %v656, %v668
    %v670 = vpop.f32.mrf.mxu0
    %671 = vdwg.mxu0
    %672 = vmatpush.bf16.msra.mxu0 %v612
    %673 = vmatpush.bf16.msra.mxu0 %v611
    %674 = vmatpush.bf16.msra.mxu0 %v610
    %675 = vmatpush.bf16.msra.mxu0 %v609
    %676 = vmatpush.bf16.msra.mxu0 %v608
    %677 = vmatpush.bf16.msra.mxu0 %v607
    %678 = vmatpush.bf16.msra.mxu0 %v606
    %679 = vmatpush.bf16.msra.mxu0 %v605
    %680 = vmatmul.bf16.gmra.mxu0 %v628
    %v681 = vpop.f32.mrf.mxu0
    %v682 = vadd.f32 %v669, %v681
    %v683 = vpop.f32.mrf.mxu0
    %684 = vdwg.mxu0
    %685 = vst [vmem:[#allocation2] sm:$0xff] %v682
    // Predicated region
    $region18: #{tpu_custom_call.1} parent=1 // pred_check
      _
    $region19: #{tpu_custom_call.1} parent=1 // pred_check_branch
      %687 = sbr.rel (0) target = $region21
    $region20: #{tpu_custom_call.1} parent=1 // pred_region
      %689 = vsyncadd [#allocation3], 0
      %s691 = sshll.u32 [#allocation2], 4
      %s692 = int_to_ptr.vmem [resolvable:$true] %s691
      %s693 = sshll.u32 %s4, 4
      %s694 = int_to_ptr.hbm [resolvable:$true] %s693
      %696 = dma.vmem_to_hbm [thread:$0]  %s692, 128, %s694, [#allocation3]
    $region21: #{tpu_custom_call.1} parent=1 // pred_fallthru
      _
    // Predicated region
    $region22: #{tpu_custom_call.1} parent=1 // pred_check
      _
    $region23: #{tpu_custom_call.1} parent=1 // pred_check_branch
      %698 = sbr.rel (0) target = $region25
    $region24: #{tpu_custom_call.1} parent=1 // pred_region
      %700 = dma.done [#allocation3], 128
    $region25: #{tpu_custom_call.1} parent=1 // pred_fallthru
      _
    %701 = vsyncpa [#allocation3], 1

</llo_original>
